<compile_context>
chip_gen: v6e
topology: v6e:2x2x1
jax: 0.10.0
libtpu: 0.0.40
codegen_flags: <defaults>
</compile_context>

<pallas_src>
import jax
import jax.numpy as jnp
from jax import lax
from jax.experimental import pallas as pl
from jax.experimental.pallas import tpu as pltpu


def npc_kernel(params_ref, x_ref, mem_ref, out_ref):
    # params_ref is a scalar-prefetch SMEM ref: [tau, momentum]
    inv_tau = 1.0 / params_ref[0]           # scalar path; sits in slack VLIW slots
    # MXU matmul: contract feature dim (dim 1) of both x [tb, D] and memory [tn, D]
    # -> [tb, tn] without any explicit transpose of the memory tile.
    acc = lax.dot_general(
        x_ref[...],
        mem_ref[...],
        dimension_numbers=(((1,), (1,)), ((), ())),
        preferred_element_type=jnp.float32,
    )
    out_ref[...] = (acc * inv_tau).astype(out_ref.dtype)


def _device_vmem_config():
    """(tile budget bytes, vmem_limit_bytes, prefer_even_grid) per TPU generation."""
    kind = ""
    try:
        kind = jax.devices()[0].device_kind.lower()
    except Exception:
        pass
    if "v7" in kind:
        # 64 MiB physical VMEM per TC; keep the budget modest but prefer an even grid
        # so dimension_semantics=("parallel", ...) balances the 2 TensorCores.
        return 26 * 1024 * 1024, 48 * 1024 * 1024, True
    if "v5" in kind or "v6" in kind:
        # 128 MiB physical VMEM; large tiles cut per-step overhead and reach the HBM
        # roofline with long DMAs. vmem_limit_bytes lifts the 16/32 MiB scoped default.
        return 64 * 1024 * 1024, 100 * 1024 * 1024, False
    # Unknown device: conservative budget that fits every generation's scoped default
    # once vmem_limit_bytes is raised.
    return 24 * 1024 * 1024, 48 * 1024 * 1024, False


def _pick_tb(B):
    """Batch tile: full batch when small, else a lane/sublane-friendly divisor."""
    if B <= 256:
        return B
    for t in (512, 256, 128):
        if B % t == 0:
            return t
    return B  # full-extent block is always legal


def _pick_tn(N, tb, D, mem_itemsize, x_itemsize, out_itemsize,
             budget_bytes, mem_buffers=2, prefer_even_grid=False):
    """Largest class-tile (multiple of 128 dividing N) that fits the VMEM budget.

    Budget counts the (possibly >2-deep) buffered memory tile, the double-buffered
    output tile, and the (resident, conservatively double-counted) x tile.
    On v7x prefer a tile giving an even grid length (TensorCore balance); otherwise
    just prefer grid length >= 2 so the pipeline has something to overlap.
    """
    candidates = [t for t in range(128, N + 1, 128) if N % t == 0]
    if not candidates:
        return N  # N < 128 (or no 128-multiple divisor): full-extent block is exempt

    def vmem_bytes(t):
        return (mem_buffers * t * D * mem_itemsize   # memory tiles (pipelined)
                + 2 * tb * t * out_itemsize          # output tile, double buffered
                + 2 * tb * D * x_itemsize)           # x tile (counted x2 to be safe)

    fitting = [t for t in candidates if vmem_bytes(t) <= budget_bytes]
    if not fitting:
        return candidates[0]
    if prefer_even_grid:
        even = [t for t in fitting if (N // t) % 2 == 0]
        if even:
            return max(even)
    multi = [t for t in fitting if N // t >= 2]
    return max(multi) if multi else max(fitting)


def non_parametric_classifier_forward(x, y, memory, params, *, tn=None, tb=None,
                                      out_dtype=jnp.float32, memory_buffers=2):
    """Forward of NonParametricClassifier.

    x:      [B, D] float32 or bfloat16
    y:      [B]    int32   (unused in forward; it only drives the memory-bank
                            update in backward -- kept for API parity)
    memory: [N, D] float32 or bfloat16 memory bank (bf16 halves the dominant HBM stream)
    params: [2]    float32 -> [tau, momentum]
    returns [B, N] out_dtype (f32 by default; bf16 cuts writeback bytes if tolerated)
    """
    del y  # TODO(synk): backward-pass memory-bank update (index_copy_) is not part of forward.
    B, D = x.shape
    N, Dm = memory.shape
    assert D == Dm, "feature dims must match"

    budget_bytes, vmem_limit_bytes, prefer_even = _device_vmem_config()
    out_itemsize = jnp.dtype(out_dtype).itemsize

    if tb is None:
        tb = _pick_tb(B)
    assert B % tb == 0, "batch must be a multiple of the batch tile"
    assert tb == B or tb % 8 == 0, "batch tile must be a multiple of 8 (or the full B)"

    if tn is None:
        tn = _pick_tn(N, tb, D, memory.dtype.itemsize, x.dtype.itemsize,
                      out_itemsize, budget_bytes, memory_buffers, prefer_even)
    assert N % tn == 0, "output_dim must be a multiple of the class tile size"
    assert tn == N or tn % 128 == 0, \
        "class tile must be a multiple of 128 (or the full output_dim)"

    grid = (B // tb, N // tn)

    mem_spec_kwargs = {}
    if memory_buffers != 2:
        # Deeper pipelining on the (pure-DMA) memory stream; budgeted in _pick_tn.
        mem_spec_kwargs["pipeline_mode"] = pl.Buffered(memory_buffers)

    grid_spec = pltpu.PrefetchScalarGridSpec(
        num_scalar_prefetch=1,          # params -> SMEM
        grid=grid,
        in_specs=[
            pl.BlockSpec((tb, D), lambda i, j, params: (i, 0)),   # x: batch tile
            pl.BlockSpec((tn, D), lambda i, j, params: (j, 0),    # memory: class tile
                         **mem_spec_kwargs),
        ],
        out_specs=pl.BlockSpec((tb, tn), lambda i, j, params: (i, j)),
    )

    cost = pl.CostEstimate(
        flops=2 * B * N * D,
        transcendentals=0,
        bytes_accessed=(N * D * memory.dtype.itemsize
                        + B * D * x.dtype.itemsize
                        + B * N * out_itemsize),
    )

    return pl.pallas_call(
        npc_kernel,
        out_shape=jax.ShapeDtypeStruct((B, N), out_dtype),
        grid_spec=grid_spec,
        cost_estimate=cost,
        compiler_params=pltpu.CompilerParams(
            # Both axes independent -> shard across TensorCores on v7x.
            dimension_semantics=("parallel", "parallel"),
            vmem_limit_bytes=vmem_limit_bytes,
        ),
    )(params, x, memory)


def make_memory(key, output_dim, input_dim, dtype=jnp.float32):
    # Mirrors: stdv = 1/sqrt(input_dim/3); memory = rand(N, D) * 2*stdv - stdv
    stdv = 1.0 / jnp.sqrt(input_dim / 3.0)
    u = jax.random.uniform(key, (output_dim, input_dim), dtype=jnp.float32)
    return (u * (2.0 * stdv) - stdv).astype(dtype)


if __name__ == "__main__":
    B, D, N = 8, 32, 256
    tau, momentum = 1.0, 0.5

    key = jax.random.PRNGKey(0)
    kx, kmem, ky = jax.random.split(key, 3)

    x = jax.random.normal(kx, (B, D), dtype=jnp.float32)
    y = jax.random.randint(ky, (B,), 0, N, dtype=jnp.int32)
    memory = make_memory(kmem, N, D)                      # f32 bank
    params = jnp.array([tau, momentum], dtype=jnp.float32)

    # f32 path: exact check against the pure-JAX reference.
    out = non_parametric_classifier_forward(x, y, memory, params)
    out = jax.block_until_ready(out)
    ref = jnp.dot(x, memory.T) / tau
    assert out.shape == (B, N)
    assert jnp.allclose(out, ref, atol=1e-5, rtol=1e-5), "mismatch vs reference (f32)"

    # bf16-bank path (the main mem-bound win): bf16 x and memory, f32 accumulation.
    x_bf16 = x.astype(jnp.bfloat16)
    mem_bf16 = memory.astype(jnp.bfloat16)
    out_bf16 = non_parametric_classifier_forward(x_bf16, y, mem_bf16, params)
    out_bf16 = jax.block_until_ready(out_bf16)
    ref_bf16 = jnp.dot(x_bf16.astype(jnp.float32), mem_bf16.astype(jnp.float32).T) / tau
    assert jnp.allclose(out_bf16, ref_bf16, atol=2e-2, rtol=2e-2), \
        "mismatch vs reference (bf16 bank)"

    print("KERNEL_OK")
</pallas_src>

<mosaic_0001>
module attributes {stable_mosaic.version = 11 : i64} {
  func.func @npc_kernel(%arg0: i32, %arg1: i32, %arg2: memref<2xf32, #tpu.memory_space<smem>>, %arg3: memref<8x32xf32, #tpu.memory_space<vmem>>, %arg4: memref<128x32xf32, #tpu.memory_space<vmem>>, %arg5: memref<8x128xf32, #tpu.memory_space<vmem>>) attributes {dimension_semantics = [#tpu.dimension_semantics<parallel>, #tpu.dimension_semantics<parallel>], iteration_bounds = array<i64: 1, 2>, scalar_prefetch = 1 : i64, scratch_operands = 0 : i64, tpu.core_type = #tpu.core_type<tc>, window_params = [{transform_indices = @transform_0, window_bounds = array<i64: 8, 32>}, {transform_indices = @transform_1, window_bounds = array<i64: 128, 32>}, {transform_indices = @transform_2, window_bounds = array<i64: 8, 128>}]} {
    %c0 = arith.constant 0 : index
    %0 = memref.load %arg2[%c0] : memref<2xf32, #tpu.memory_space<smem>>
    %cst = arith.constant 1.000000e+00 : f32
    %1 = arith.divf %cst, %0 : f32
    %c0_0 = arith.constant 0 : index
    %c0_1 = arith.constant 0 : index
    %2 = vector.load %arg3[%c0_0, %c0_1] : memref<8x32xf32, #tpu.memory_space<vmem>>, vector<8x32xf32>
    %c0_2 = arith.constant 0 : index
    %c0_3 = arith.constant 0 : index
    %3 = vector.load %arg4[%c0_2, %c0_3] : memref<128x32xf32, #tpu.memory_space<vmem>>, vector<128x32xf32>
    %cst_4 = arith.constant dense<0.000000e+00> : vector<8x128xf32>
    %4 = tpu.matmul %2, %3, %cst_4 {dimension_numbers = #tpu.dot_dimension_numbers<[1], [1], [0], [0], [0, 0, 1, 0], [], []>} : vector<8x32xf32>, vector<128x32xf32>, vector<8x128xf32> -> vector<8x128xf32>
    %5 = vector.broadcast %1 : f32 to vector<8x128xf32>
    %6 = arith.mulf %4, %5 : vector<8x128xf32>
    %c0_5 = arith.constant 0 : index
    %c0_6 = arith.constant 0 : index
    %7 = vector.load %arg5[%c0_5, %c0_6] : memref<8x128xf32, #tpu.memory_space<vmem>>, vector<8x128xf32>
    tpu.vector_store %arg5[%c0_5, %c0_6], %6 {strides = array<i32>} : memref<8x128xf32, #tpu.memory_space<vmem>>, vector<8x128xf32>,
    return
  }
  func.func @transform_0(%arg0: i32, %arg1: i32, %arg2: memref<2xf32, #tpu.memory_space<smem>>) -> (i32, i32) {
    %c0_i32 = arith.constant 0 : i32
    %c0_i32_0 = arith.constant 0 : i32
    return %arg0, %c0_i32 : i32, i32
  }
  func.func @transform_1(%arg0: i32, %arg1: i32, %arg2: memref<2xf32, #tpu.memory_space<smem>>) -> (i32, i32) {
    %c0_i32 = arith.constant 0 : i32
    %c0_i32_0 = arith.constant 0 : i32
    return %arg1, %c0_i32 : i32, i32
  }
  func.func @transform_2(%arg0: i32, %arg1: i32, %arg2: memref<2xf32, #tpu.memory_space<smem>>) -> (i32, i32) {
    %c0_i32 = arith.constant 0 : i32
    return %arg0, %arg1 : i32, i32
  }
}

</mosaic_0001>

<llo_original>
// kernel: tpu_custom_call.1
$region0: #{tpu_custom_call.1}
  #allocation0 [shape = 'u32[]', space=smem, size = 0x4, offset = 0x4, fixed_abs, tag = 'smem constant byte address 0x4 - core index']
  #allocation1 [shape = 'u32[144,128]{1,0:T(1,128)}', space=vmem, size = 0x12000, scoped, tag = 'internal scratch']
  #allocation2 [shape = 's32[1]{0}', space=sflag, size = 0x4, scoped, tag = 'scoped memory for tpu_custom_call.1']
  #allocation3 [shape = 'u8[512]{0}', space=smem, size = 0x200, scoped, tag = 'prefetched SMEM operand 0']
  %s0 = inlined_call_operand.vmem [shape: f32[2], index: 0, kind: input, shape index: {}]
  %s1 = inlined_call_operand.vmem [shape: f32[8,32], index: 1, kind: input, shape index: {}]
  %s2 = inlined_call_operand.vmem [shape: f32[256,32], index: 2, kind: input, shape index: {}]
  %s3 = inlined_call_operand.hbm [shape: f32[8,256], index: 3, kind: output, shape index: {}]
  %s4 = sld [smem:[#allocation0]]
  $region41: #{tpu_custom_call.1} parent=0
    _
  %s6 = ssub.s32 1, %s4
  %s7 = scalar_select 0, %s6, %s4
  %s8 = sshll.u32 %s0, 4
  %s9 = int_to_ptr.vmem [resolvable:$true] %s8
  %11 = dma.vmem_to_smem %s9, 16, [#allocation3], [#allocation2]
  %12 = dma.done [#allocation2], 16
  %13 = sfence
  $region1: #{tpu_custom_call.1} parent=0
    #allocation4 [shape = 'u8[8192]{0}', space=vmem, size = 0x2000, scoped, tag = 'output window, operand 0']
    #allocation5 [shape = 's32[2]{0}', space=sflag, size = 0x8, scoped, tag = 'scoped memory for tpu_custom_call.1']
    %14 = vsyncpa [#allocation5], 0
    %s15 = scalar_lea.sflag [#allocation5], 1
    %16 = vsyncpa %s15, 0
    loop: start=0, step=1, limit=4
    $region2: #{tpu_custom_call.1} parent=1 // loop_pre_header
      _
    $region3: #{tpu_custom_call.1} parent=1 // loop_header
      %s18 = sphi 0, %s22
      %p19 = scmp.ge.s32.totalorder %s18, 4
      %s25 = sphi 0, %s37
      %s26 = sphi 0, %s33
      %s27 = sphi 0, %s25
      %s28 = sphi 0, %s26
      %s29 = sphi 0, %s27
      %s30 = sphi 0, %s28
      %s40 = sphi 0, %s42
      %s43 = sphi 0, %s40
      %s44 = sphi 0, %s43
      %s60 = sphi 0, %s44
      %s66 = sphi 0, %s68
      %s69 = sphi 0, %s66
      %s70 = sphi 0, %s69
      %s86 = sphi 0, %s70
      %s94 = sphi 0, %s96
      %s97 = sphi 0, %s94
      %s98 = sphi 0, %s97
      %s114 = sphi 0, %s98
    $region4: #{tpu_custom_call.1} parent=1 // loop_header_branch
      %21 = sbr.rel (%p19) target = $region8
    $region5: #{tpu_custom_call.1} parent=1 // loop_body
      %s23 = ssub.s32 %s18, 1
      %s24 = ssub.s32 %s18, 2
      %s31 = sadd.s32 1, %s26
      %p32 = scmp.ge.s32.totalorder %s31, 2
      %s33 = scalar_select %p32, 0, %s31
      %s34 = sadd.s32 1, %s25
      %s35 = scalar_select %p32, %s34, %s25
      %p36 = scmp.ge.s32.totalorder %s35, 1
      %s37 = scalar_select %p36, 0, %s35
      %s38 = ssub.s32 %s25, %s37
      %p39 = scmp.eq.s32.totalorder %s38, 0
      %s41 = sadd.s32 %s40, 1
      %s42 = scalar_select %p39, %s40, %s41
      %p45 = pneg %p39
      %p46 = scmp.eq.s32.totalorder %s18, 1
      %p47 = por %p45, %p46
      %p48 = scmp.ne.s32.totalorder %s40, %s43
      %p49 = scmp.eq.s32.totalorder %s18, 0
      %p50 = por %p48, %p49
      %p51 = scmp.ne.s32.totalorder %s40, %s43
      %p52 = scmp.eq.s32.totalorder %s23, 1
      %p53 = por %p51, %p52
      %p54 = scmp.ne.s32.totalorder %s43, %s44
      %p55 = scmp.eq.s32.totalorder %s23, 0
      %p56 = por %p54, %p55
      %p57 = scmp.ne.s32.totalorder %s43, %s44
      %p58 = scmp.eq.s32.totalorder %s24, 1
      %p59 = por %p57, %p58
      %p61 = scmp.ne.s32.totalorder %s44, %s60
      %p62 = scmp.eq.s32.totalorder %s24, 0
      %p63 = por %p61, %p62
      %s64 = ssub.s32 %s26, %s33
      %p65 = scmp.eq.s32.totalorder %s64, 0
      %s67 = sadd.s32 %s66, 1
      %s68 = scalar_select %p65, %s66, %s67
      %p71 = pneg %p65
      %p72 = scmp.eq.s32.totalorder %s18, 1
      %p73 = por %p71, %p72
      %p74 = scmp.ne.s32.totalorder %s66, %s69
      %p75 = scmp.eq.s32.totalorder %s18, 0
      %p76 = por %p74, %p75
      %p77 = scmp.ne.s32.totalorder %s66, %s69
      %p78 = scmp.eq.s32.totalorder %s23, 1
      %p79 = por %p77, %p78
      %p80 = scmp.ne.s32.totalorder %s69, %s70
      %p81 = scmp.eq.s32.totalorder %s23, 0
      %p82 = por %p80, %p81
      %p83 = scmp.ne.s32.totalorder %s69, %s70
      %p84 = scmp.eq.s32.totalorder %s24, 1
      %p85 = por %p83, %p84
      %p87 = scmp.ne.s32.totalorder %s70, %s86
      %p88 = scmp.eq.s32.totalorder %s24, 0
      %p89 = por %p87, %p88
      %s90 = ssub.s32 %s25, %s37
      %s91 = ssub.s32 %s26, %s33
      %s92 = sor.u32 %s90, %s91
      %p93 = scmp.eq.s32.totalorder %s92, 0
      %s95 = sadd.s32 %s94, 1
      %s96 = scalar_select %p93, %s94, %s95
      %p99 = pneg %p93
      %p100 = scmp.eq.s32.totalorder %s18, 1
      %p101 = por %p99, %p100
      %p102 = scmp.ne.s32.totalorder %s94, %s97
      %p103 = scmp.eq.s32.totalorder %s18, 0
      %p104 = por %p102, %p103
      %p105 = scmp.ne.s32.totalorder %s94, %s97
      %p106 = scmp.eq.s32.totalorder %s23, 1
      %p107 = por %p105, %p106
      %p108 = scmp.ne.s32.totalorder %s97, %s98
      %p109 = scmp.eq.s32.totalorder %s23, 0
      %p110 = por %p108, %p109
      %p111 = scmp.ne.s32.totalorder %s97, %s98
      %p112 = scmp.eq.s32.totalorder %s24, 1
      %p113 = por %p111, %p112
      %p115 = scmp.ne.s32.totalorder %s98, %s114
      %p116 = scmp.eq.s32.totalorder %s24, 0
      %p117 = por %p115, %p116
      %p118 = scmp.le.s32.totalorder 1, %s18
      %p119 = scmp.lt.s32.totalorder %s18, 3
      %p120 = pnand %p118, %p119
      %p121 = pneg %p120
      // Predicated region
      $region9: #{tpu_custom_call.1} parent=5 // pred_check
        _
      $region10: #{tpu_custom_call.1} parent=5 // pred_check_branch
        %123 = sbr.rel (%p120) target = $region12
      $region11: #{tpu_custom_call.1} parent=5 // pred_region
        %s124 = ssub.s32 %s18, 1
        // Predicated region
        $region13: #{tpu_custom_call.1} parent=11 // pred_check
          %p125 = pneg %p56
        $region14: #{tpu_custom_call.1} parent=11 // pred_check_branch
          %127 = sbr.rel (%p125) target = $region16
        $region15: #{tpu_custom_call.1} parent=11 // pred_region
          %p128 = scmp.lt.s32.totalorder %s27, 0
          %s129 = scalar_select %p128, %s27, 0
          %s130 = smul.addr %s129, 8
          %s131 = scalar_lea.vmem %s1, %s130
        $region16: #{tpu_custom_call.1} parent=11 // pred_fallthru
          _
      $region12: #{tpu_custom_call.1} parent=5 // pred_fallthru
        _
      %p132 = scmp.lt.s32.totalorder %s18, 2
      // Predicated region
      $region17: #{tpu_custom_call.1} parent=5 // pred_check
        %p133 = pneg %p132
      $region18: #{tpu_custom_call.1} parent=5 // pred_check_branch
        %135 = sbr.rel (%p133) target = $region20
      $region19: #{tpu_custom_call.1} parent=5 // pred_region
        // Predicated region
        $region21: #{tpu_custom_call.1} parent=19 // pred_check
          %p136 = pneg %p76
        $region22: #{tpu_custom_call.1} parent=19 // pred_check_branch
          %138 = sbr.rel (%p136) target = $region24
        $region23: #{tpu_custom_call.1} parent=19 // pred_region
          %s139 = smul.u32 16, %s26
          %p140 = scmp.lt.s32.totalorder %s139, 31
          %s141 = scalar_select %p140, %s139, 31
          %s142 = smul.addr %s141, 8
          %s143 = scalar_lea.vmem %s2, %s142
          %s144 = smul.u32 16, %s26
        $region24: #{tpu_custom_call.1} parent=19 // pred_fallthru
          _
      $region20: #{tpu_custom_call.1} parent=5 // pred_fallthru
        _
      %p145 = scmp.le.s32.totalorder 1, %s18
      %p146 = scmp.lt.s32.totalorder %s18, 3
      %p147 = pnand %p145, %p146
      %p148 = pneg %p147
      // Predicated region
      $region25: #{tpu_custom_call.1} parent=5 // pred_check
        _
      $region26: #{tpu_custom_call.1} parent=5 // pred_check_branch
        %150 = sbr.rel (%p147) target = $region28
      $region27: #{tpu_custom_call.1} parent=5 // pred_region
        %s151 = ssub.s32 %s18, 1
        %p152 = scmp.lt.s32.totalorder %s27, 0
        %s153 = scalar_select %p152, %s27, 0
        %s154 = smul.addr %s153, 8
        %s155 = scalar_lea.vmem %s1, %s154
        %p156 = pneg %p56
        %p157 = pneg %p53
        %s158 = smul.u32 16, %s28
        %p159 = scmp.lt.s32.totalorder %s158, 31
        %s160 = scalar_select %p159, %s158, 31
        %s161 = smul.addr %s160, 8
        %s162 = scalar_lea.vmem %s2, %s161
        %p163 = pneg %p82
        %p164 = pneg %p79
        %p165 = pneg %p110
        %p166 = pneg %p107
        %s167 = sand.u32 %s97, 1
        %s168 = scalar_lea.sflag [#allocation5], %s167
        %s169 = sand.u32 %s97, 1
        %s170 = smul.addr %s169, 8
        %s171 = scalar_lea.vmem [#allocation4], %s170
        %p172 = scmp.lt.s32.totalorder %s27, 0
        %s173 = scalar_select %p172, %s27, 0
        %s174 = smul.addr %s173, 8
        %s175 = scalar_lea.vmem %s1, %s174
        %s176 = smul.u32 16, %s28
        %p177 = scmp.lt.s32.totalorder %s176, 31
        %s178 = scalar_select %p177, %s176, 31
        %s179 = smul.addr %s178, 8
        %s180 = scalar_lea.vmem %s2, %s179
        %s181 = smul.u32 16, %s28
        %s182 = sld [smem:[#allocation3]]
        %v183 = vstv %s182
        %v184 = vrcp.pop %v183
        %s185 = vtos %v184
        %v186 = vld [vmem:[%s175] sm:$0xff]
        %v187 = vld [vmem:[%s180] sm:$0xff]
        %v188 = vld [vmem:[%s180 + $0x8] sm:$0xff]
        %v189 = vld [vmem:[%s180 + $0x10] sm:$0xff]
        %v190 = vld [vmem:[%s180 + $0x18] sm:$0xff]
        %v191 = vld [vmem:[%s180 + $0x20] sm:$0xff]
        %v192 = vld [vmem:[%s180 + $0x28] sm:$0xff]
        %v193 = vld [vmem:[%s180 + $0x30] sm:$0xff]
        %v194 = vld [vmem:[%s180 + $0x38] sm:$0xff]
        %v195 = vld [vmem:[%s180 + $0x40] sm:$0xff]
        %v196 = vld [vmem:[%s180 + $0x48] sm:$0xff]
        %v197 = vld [vmem:[%s180 + $0x50] sm:$0xff]
        %v198 = vld [vmem:[%s180 + $0x58] sm:$0xff]
        %v199 = vld [vmem:[%s180 + $0x60] sm:$0xff]
        %v200 = vld [vmem:[%s180 + $0x68] sm:$0xff]
        %v201 = vld [vmem:[%s180 + $0x70] sm:$0xff]
        %v202 = vld [vmem:[%s180 + $0x78] sm:$0xff]
        %vm203 = vcmask 261120
        %v205 = vsel %vm203, %v186, 0
        %v208 = vsel %vm203, %v187, 0
        %v211 = vsel %vm203, %v188, 0
        %v214 = vsel %vm203, %v189, 0
        %v217 = vsel %vm203, %v190, 0
        %v220 = vsel %vm203, %v191, 0
        %v223 = vsel %vm203, %v192, 0
        %v226 = vsel %vm203, %v193, 0
        %v229 = vsel %vm203, %v194, 0
        %v232 = vsel %vm203, %v195, 0
        %v235 = vsel %vm203, %v196, 0
        %v238 = vsel %vm203, %v197, 0
        %v241 = vsel %vm203, %v198, 0
        %v244 = vsel %vm203, %v199, 0
        %v247 = vsel %vm203, %v200, 0
        %v250 = vsel %vm203, %v201, 0
        %v253 = vsel %vm203, %v202, 0
        %255 = vmatprep.subr.mxu0 0.0
        %256 = vmatpush1.xpose.msra.mxu0 %v253
        %257 = vmatprep.subr.mxu0 0.0
        %258 = vmatpush1.xpose.msra.mxu0 %v250
        %259 = vmatprep.subr.mxu0 0.0
        %260 = vmatpush1.xpose.msra.mxu0 %v247
        %261 = vmatprep.subr.mxu0 0.0
        %262 = vmatpush1.xpose.msra.mxu0 %v244
        %263 = vmatprep.subr.mxu0 0.0
        %264 = vmatpush1.xpose.msra.mxu0 %v241
        %265 = vmatprep.subr.mxu0 0.0
        %266 = vmatpush1.xpose.msra.mxu0 %v238
        %267 = vmatprep.subr.mxu0 0.0
        %268 = vmatpush1.xpose.msra.mxu0 %v235
        %269 = vmatprep.subr.mxu0 0.0
        %270 = vmatpush1.xpose.msra.mxu0 %v232
        %271 = vmatprep.subr.mxu0 0.0
        %272 = vmatpush1.xpose.msra.mxu0 %v229
        %273 = vmatprep.subr.mxu0 0.0
        %274 = vmatpush1.xpose.msra.mxu0 %v226
        %275 = vmatprep.subr.mxu0 0.0
        %276 = vmatpush1.xpose.msra.mxu0 %v223
        %277 = vmatprep.subr.mxu0 0.0
        %278 = vmatpush1.xpose.msra.mxu0 %v220
        %279 = vmatprep.subr.mxu0 0.0
        %280 = vmatpush1.xpose.msra.mxu0 %v217
        %281 = vmatprep.subr.mxu0 0.0
        %282 = vmatpush1.xpose.msra.mxu0 %v214
        %283 = vmatprep.subr.mxu0 0.0
        %284 = vmatpush1.xpose.msra.mxu0 %v211
        %285 = vmatprep.subr.mxu0 0.0
        %286 = vmatpush1.xpose.msra.mxu0 %v208
        %287 = vmatprep.subr.mxu0 0.0
        %288 = vmatpush2.xpose.msra.mxu0 0.0
        %289 = vmatprep.subr.mxu0 0.0
        %290 = vmatpush2.xpose.msra.mxu0 0.0
        %291 = vmatprep.subr.mxu0 0.0
        %292 = vmatpush2.xpose.msra.mxu0 0.0
        %293 = vmatprep.subr.mxu0 0.0
        %294 = vmatpush2.xpose.msra.mxu0 0.0
        %295 = vmatprep.subr.mxu0 0.0
        %296 = vmatpush2.xpose.msra.mxu0 0.0
        %297 = vmatprep.subr.mxu0 0.0
        %298 = vmatpush2.xpose.msra.mxu0 0.0
        %299 = vmatprep.subr.mxu0 0.0
        %300 = vmatpush2.xpose.msra.mxu0 0.0
        %301 = vmatprep.subr.mxu0 0.0
        %302 = vmatpush2.xpose.msra.mxu0 0.0
        %303 = vmatprep.subr.mxu0 0.0
        %304 = vmatpush2.xpose.msra.mxu0 0.0
        %305 = vmatprep.subr.mxu0 0.0
        %306 = vmatpush2.xpose.msra.mxu0 0.0
        %307 = vmatprep.subr.mxu0 0.0
        %308 = vmatpush2.xpose.msra.mxu0 0.0
        %309 = vmatprep.subr.mxu0 0.0
        %310 = vmatpush2.xpose.msra.mxu0 0.0
        %311 = vmatprep.subr.mxu0 0.0
        %312 = vmatpush2.xpose.msra.mxu0 0.0
        %313 = vmatprep.subr.mxu0 0.0
        %314 = vmatpush2.xpose.msra.mxu0 0.0
        %315 = vmatprep.subr.mxu0 0.0
        %316 = vmatpush2.xpose.msra.mxu0 0.0
        %317 = vmatprep.subr.mxu0 0.0
        %318 = vmatpush2.xpose.msra.mxu0 0.0
        %319 = vmatprep.mubr.f32.mxu0 0.0
        %320 = vmatmul.mubr.f32.gmra.mxu0 %v205
        %v321 = vpop.f32.mrf.mxu0
        %v322 = vadd.f32 0.0, %v321
        %v323 = vpop.f32.mrf.mxu0
        %324 = vdwg.mxu0
        %v325 = vstv %s185
        %v326 = vmul.f32 %v322, %v325
        %327 = vst [vmem:[%s171] sm:$0xff] %v326
        %s328 = sand.u32 %s97, 1
        %s329 = scalar_lea.sflag [#allocation5], %s328
        %s330 = sand.u32 %s97, 1
        %s331 = smul.addr %s330, 8
        %s332 = scalar_lea.vmem [#allocation4], %s331
        // Predicated region
        $region29: #{tpu_custom_call.1} parent=27 // pred_check
          %p333 = pneg %p107
        $region30: #{tpu_custom_call.1} parent=27 // pred_check_branch
          %335 = sbr.rel (%p333) target = $region32
        $region31: #{tpu_custom_call.1} parent=27 // pred_region
          %s337 = ssub.s32 128, 128
          %338 = vsyncadd %s329, %s337
          %s339 = smul.addr %s27, 2
          %s340 = sadd.s32 %s28, %s339
          %s341 = smul.addr %s340, 128
          %s342 = scalar_lea.hbm %s3, %s341
          %s344 = sshll.u32 %s332, 4
          %s345 = int_to_ptr.vmem [resolvable:$true] %s344
          %347 = dma.vmem_to_hbm [thread:$0]  %s345, 128, %s342, %s329
        $region32: #{tpu_custom_call.1} parent=27 // pred_fallthru
          _
      $region28: #{tpu_custom_call.1} parent=5 // pred_fallthru
        _
      %p348 = scmp.le.s32.totalorder 2, %s18
      // Predicated region
      $region33: #{tpu_custom_call.1} parent=5 // pred_check
        %p349 = pneg %p348
      $region34: #{tpu_custom_call.1} parent=5 // pred_check_branch
        %351 = sbr.rel (%p349) target = $region36
      $region35: #{tpu_custom_call.1} parent=5 // pred_region
        %s352 = ssub.s32 %s18, 2
        // Predicated region
        $region37: #{tpu_custom_call.1} parent=35 // pred_check
          %p353 = pneg %p113
        $region38: #{tpu_custom_call.1} parent=35 // pred_check_branch
          %355 = sbr.rel (%p353) target = $region40
        $region39: #{tpu_custom_call.1} parent=35 // pred_region
          %s356 = sand.u32 %s98, 1
          %s357 = scalar_lea.sflag [#allocation5], %s356
          %s358 = sand.u32 %s98, 1
          %s359 = smul.addr %s358, 8
          %s360 = scalar_lea.vmem [#allocation4], %s359
          %361 = dma.done %s357, 128
        $region40: #{tpu_custom_call.1} parent=35 // pred_fallthru
          _
      $region36: #{tpu_custom_call.1} parent=5 // pred_fallthru
        _
    $region6: #{tpu_custom_call.1} parent=1 // loop_footer
      %s22 = sadd.s32 1, %s18
    $region7: #{tpu_custom_call.1} parent=1 // loop_footer_branch
      %17 = sbr.rel target = $region3
    $region8: #{tpu_custom_call.1} parent=1 // loop_exit
      _
    %362 = vsyncpa [#allocation5], 1
    %s363 = scalar_lea.sflag [#allocation5], 1
    %364 = vsyncpa %s363, 1

</llo_original>
